<compile_context>
chip_gen: v6e
topology: v6e:2x2x1
jax: 0.10.0
libtpu: 0.0.40
codegen_flags: <defaults>
</compile_context>

<pallas_src>
import math

import jax
import jax.numpy as jnp
from jax import lax
from jax.experimental import pallas as pl
from jax.experimental.pallas import tpu as pltpu

_EPSILON = 1e-07
_LOG_EPS = float(math.log(_EPSILON))
_LOG_1M_EPS = float(math.log(1.0 - _EPSILON))
_SUBLANE = 8
_VMEM_HEADROOM = 4 * 1024 * 1024      # for weight block / semaphores / compiler scratch
_LIVE_F32_TEMPS = 8                   # conservative count of live tile-sized temporaries


def _round_down(a, m):
    return a // m * m


def _vmem_limit_bytes():
    """Per-generation scoped-VMEM budget: 64 MiB on v5e/v6e, ~48 MiB on v7x."""
    try:
        cap = pltpu.get_tpu_info().vmem_capacity_bytes
    except Exception:
        cap = 64 * 1024 * 1024        # conservative (v7x-sized) fallback
    return int(min(64 * 1024 * 1024, cap * 3 // 4))


def _focal_tile(x_ref, y_ref, w_ref, out_ref, acc_ref, *, dense_targets,
                tile_n, n_total, n_classes, gamma, label_smooth, mask_rows):
    p_idx = pl.program_id(0)
    t_idx = pl.program_id(1)
    g_idx = p_idx * pl.num_programs(1) + t_idx      # global (unclamped) row-tile index

    x = x_ref[...].astype(jnp.float32)              # (tile_n, C)
    tn, c = x.shape

    row_valid = None
    if mask_rows:
        rows = g_idx * tile_n + lax.broadcasted_iota(jnp.int32, (tn, 1), 0)
        row_valid = rows < n_total                  # kills ragged tail + phantom tiles
        x = jnp.where(row_valid, x, 0.0)            # sanitize garbage before exp/log

    if dense_targets:
        one_hot = y_ref[...].astype(jnp.float32)    # dense / soft targets
    else:
        col = lax.broadcasted_iota(jnp.int32, (tn, c), 1)
        one_hot = (col == y_ref[...]).astype(jnp.float32)
        if label_smooth:
            one_hot = one_hot * (1.0 - label_smooth) + label_smooth / n_classes

    if row_valid is not None:
        one_hot = jnp.where(row_valid, one_hot, 0.0)

    # log-softmax via log-sum-exp: one log per row instead of one per element.
    m = jnp.max(x, axis=-1, keepdims=True)
    e = jnp.exp(x - m)
    s = jnp.sum(e, axis=-1, keepdims=True)
    logp = (x - m) - jnp.log(s)
    # clamp(log p) == log(clamp(p)) (log monotone) -> matches the reference eps-clamp
    logp = jnp.clip(logp, _LOG_EPS, _LOG_1M_EPS)

    loss = -one_hot * logp

    if gamma != 0.0:
        # focal modulation uses the clamped probabilities (reference semantics)
        p = e * pl.reciprocal(s, approx=False)      # one reciprocal per row
        p = jnp.clip(p, _EPSILON, 1.0 - _EPSILON)
        diff = jnp.abs(one_hot - p)
        g_int = int(round(gamma))
        if abs(gamma - g_int) < 1e-12 and 1 <= g_int <= 8:
            mod = diff                              # integer power -> plain VPU multiplies
            for _ in range(g_int - 1):
                mod = mod * diff
        else:
            mod = diff ** gamma                     # generic fallback
        loss = loss * mod
        # TODO(synk): v7x-only per-row focal fast path (sparse targets, no smoothing,
        # no class weight) would skip the full-tile diff/pow chain; not implemented.

    if w_ref is not None:
        loss = loss * w_ref[...]                    # (1, C) broadcast over rows

    @pl.when(t_idx == 0)
    def _():
        acc_ref[...] = jnp.zeros_like(acc_ref)

    # row-axis reduce only (mostly VPU adds); lane reduce deferred to the epilogue
    acc_ref[...] += jnp.sum(loss, axis=0, keepdims=True)

    @pl.when(t_idx == pl.num_programs(1) - 1)
    def _():
        out_ref[...] = jnp.sum(acc_ref[...]).reshape(1, 1, 1)


def _make_kernel(has_weight, **static):
    def kernel(*refs):
        if has_weight:
            x_ref, y_ref, w_ref, out_ref, acc_ref = refs
        else:
            x_ref, y_ref, out_ref, acc_ref = refs
            w_ref = None
        _focal_tile(x_ref, y_ref, w_ref, out_ref, acc_ref, **static)
    return kernel


class FocalLoss:
    """Pallas-TPU port of fire/loss.py::FocalLoss forward."""

    def __init__(self, label_smooth=0, gamma=0.0, weight=None):
        self.gamma = float(gamma)
        self.label_smooth = float(label_smooth)
        self.weight = (None if weight is None
                       else jnp.asarray(weight, jnp.float32).reshape(1, -1))

    def __call__(self, x, y, sample_weights=0, sample_weight_img_names=None,
                 max_rows_per_tile=None):
        # TODO(synk): sample_weights / 'yxboard' image-name reweighting needs string
        # inputs; no in-kernel equivalent, not implemented.
        x = jnp.asarray(x)
        y = jnp.asarray(y)
        n, c = x.shape
        dense = y.ndim != 1
        has_weight = self.weight is not None

        # ---- per-generation VMEM budget -> row tile size (no host padding) ----
        vmem_limit = _vmem_limit_bytes()
        bytes_per_row = c * 4 + (c * 4 if dense else 4)          # x + y per row (HBM/IO)
        per_row_vmem = 2 * bytes_per_row + _LIVE_F32_TEMPS * c * 4
        budget_rows = max(_SUBLANE, (vmem_limit - _VMEM_HEADROOM) // per_row_vmem)
        if max_rows_per_tile is not None:                        # testing / tuning knob
            budget_rows = min(budget_rows, max_rows_per_tile)

        if n <= budget_rows:
            tile_n = n                          # single full-extent block, no masking
            num_tiles = 1
            mask_rows = False
        else:
            tile_n = max(_SUBLANE, _round_down(budget_rows, _SUBLANE))
            num_tiles = pl.cdiv(n, tile_n)
            mask_rows = (n % tile_n) != 0       # ragged last tile

        # Padding-free 2-way split (dual-TensorCore parts).  An odd tile count gives
        # one duplicated "phantom" tile whose rows are fully masked in-kernel.
        n_par = 2 if num_tiles >= 2 else 1
        tiles_per_par = pl.cdiv(num_tiles, n_par)
        if n_par * tiles_per_par == num_tiles:
            def row_map(p, t):
                return (p * tiles_per_par + t, 0)
        else:
            mask_rows = True
            last_tile = num_tiles - 1

            def row_map(p, t):
                return (jnp.minimum(p * tiles_per_par + t, last_tile), 0)

        if dense:
            y_in = y.astype(jnp.float32)
            y_spec = pl.BlockSpec((tile_n, c), row_map)
        else:
            y_in = y.astype(jnp.int32).reshape(n, 1)
            y_spec = pl.BlockSpec((tile_n, 1), row_map)

        operands = [x, y_in]
        in_specs = [pl.BlockSpec((tile_n, c), row_map), y_spec]
        if has_weight:
            operands.append(self.weight)
            in_specs.append(pl.BlockSpec((1, c), lambda p, t: (0, 0)))

        kernel = _make_kernel(
            has_weight,
            dense_targets=dense, tile_n=tile_n, n_total=n, n_classes=c,
            gamma=self.gamma, label_smooth=self.label_smooth, mask_rows=mask_rows)

        partials = pl.pallas_call(
            kernel,
            out_shape=jax.ShapeDtypeStruct((n_par, 1, 1), jnp.float32),
            grid=(n_par, tiles_per_par),
            in_specs=in_specs,
            out_specs=pl.BlockSpec((1, 1, 1), lambda p, t: (p, 0, 0)),
            scratch_shapes=[pltpu.VMEM((1, c), jnp.float32)],
            compiler_params=pltpu.CompilerParams(
                dimension_semantics=("parallel", "arbitrary"),
                vmem_limit_bytes=vmem_limit),
        )(*operands)

        # combine per-core partial sums and take the batch mean (global N)
        return jnp.sum(partials) / jnp.float32(n)


def _reference(x, y, label_smooth=0.0, gamma=0.0, weight=None):
    """Pure-JAX reference mirroring the PyTorch forward."""
    x = jnp.asarray(x, jnp.float32)
    if y.ndim == 1:
        one_hot = jax.nn.one_hot(y, x.shape[1], dtype=jnp.float32)
        if label_smooth:
            one_hot = one_hot * (1 - label_smooth) + label_smooth / x.shape[1]
    else:
        one_hot = y.astype(jnp.float32)
    p = jax.nn.softmax(x, axis=1)
    p = jnp.clip(p, _EPSILON, 1.0 - _EPSILON)
    loss = -one_hot * jnp.log(p)
    if gamma != 0.0:
        loss = loss * jnp.abs(one_hot - p) ** gamma
    if weight is not None:
        loss = weight * loss
    return jnp.mean(jnp.sum(loss, -1))


if __name__ == "__main__":
    key = jax.random.PRNGKey(0)
    kx, ky, kd, kw, kx2, ky2 = jax.random.split(key, 6)

    N, C = 8, 32
    x = jax.random.normal(kx, (N, C), dtype=jnp.float32)
    y = jax.random.randint(ky, (N,), 0, C, dtype=jnp.int32)

    checks = []

    # 1) default config
    checks.append((FocalLoss()(x, y), _reference(x, y), 1e-5))

    # 2) label smoothing + gamma=2 + per-class weight
    w = jax.random.uniform(kw, (C,), minval=0.5, maxval=1.5, dtype=jnp.float32)
    checks.append((FocalLoss(label_smooth=0.1, gamma=2.0, weight=w)(x, y),
                   _reference(x, y, 0.1, 2.0, w), 1e-5))

    # 3) dense (soft) targets, batch not a multiple of 8 (full-extent block)
    N3 = 10
    x3 = jax.random.normal(kx, (N3, C), dtype=jnp.float32)
    yd = jax.nn.softmax(jax.random.normal(kd, (N3, C), dtype=jnp.float32), axis=-1)
    checks.append((FocalLoss(gamma=2.0)(x3, yd),
                   _reference(x3, yd, 0.0, 2.0, None), 1e-5))

    # 4) larger batch, default tiling -> single big tile
    N2, C2 = 2304, 32
    x2 = jax.random.normal(kx2, (N2, C2), dtype=jnp.float32)
    y2 = jax.random.randint(ky2, (N2,), 0, C2, dtype=jnp.int32)
    fl2 = FocalLoss(label_smooth=0.1, gamma=2.0)
    ref2 = _reference(x2, y2, 0.1, 2.0, None)
    checks.append((fl2(x2, y2), ref2, 1e-4))

    # 5) forced multi-tile: even split across the 2-way axis + ragged last tile
    checks.append((fl2(x2, y2, max_rows_per_tile=640), ref2, 1e-4))

    # 6) forced multi-tile: odd tile count -> clamped index_map + masked phantom tile
    checks.append((fl2(x2, y2, max_rows_per_tile=768), ref2, 1e-4))

    for o, r, tol in checks:
        jax.block_until_ready(o)
        assert jnp.allclose(o, r, rtol=tol, atol=tol), (o, r)

    print("KERNEL_OK")
</pallas_src>

<mosaic_0001>
module attributes {stable_mosaic.version = 11 : i64} {
  func.func @kernel(%arg0: i32, %arg1: i32, %arg2: memref<8x32xf32, #tpu.memory_space<vmem>>, %arg3: memref<8x1xi32, #tpu.memory_space<vmem>>, %arg4: memref<1x1x1xf32, #tpu.memory_space<vmem>>, %arg5: memref<1x32xf32, #tpu.memory_space<vmem>>) attributes {dimension_semantics = [#tpu.dimension_semantics<parallel>, #tpu.dimension_semantics<arbitrary>], iteration_bounds = array<i64: 1, 1>, scalar_prefetch = 0 : i64, scratch_operands = 1 : i64, tpu.core_type = #tpu.core_type<tc>, window_params = [{transform_indices = @transform_0, window_bounds = array<i64: 8, 32>}, {transform_indices = @transform_1, window_bounds = array<i64: 8, 1>}, {transform_indices = @transform_2, window_bounds = array<i64: 1, 1, 1>}]} {
    %c0 = arith.constant 0 : index
    %c0_0 = arith.constant 0 : index
    %0 = vector.load %arg2[%c0, %c0_0] : memref<8x32xf32, #tpu.memory_space<vmem>>, vector<8x32xf32>
    %1 = tpu.iota {dimensions = array<i32: 1>} : vector<8x32xi32>
    %c0_1 = arith.constant 0 : index
    %c0_2 = arith.constant 0 : index
    %2 = vector.load %arg3[%c0_1, %c0_2] : memref<8x1xi32, #tpu.memory_space<vmem>>, vector<8x1xi32>
    %3 = vector.broadcast %2 : vector<8x1xi32> to vector<8x32xi32>
    %4 = arith.cmpi eq, %1, %3 : vector<8x32xi32>
    %5 = arith.extui %4 : vector<8x32xi1> to vector<8x32xi32>
    %6 = arith.sitofp %5 : vector<8x32xi32> to vector<8x32xf32>
    %cst = arith.constant dense<0xFF800000> : vector<8xf32>
    %7 = vector.multi_reduction <maximumf>, %0, %cst [1] : vector<8x32xf32> to vector<8xf32>
    %8 = vector.shape_cast %7 : vector<8xf32> to vector<8x1xf32>
    %9 = vector.broadcast %8 : vector<8x1xf32> to vector<8x32xf32>
    %10 = arith.subf %0, %9 : vector<8x32xf32>
    %11 = math.exp %10 : vector<8x32xf32>
    %cst_3 = arith.constant dense<0.000000e+00> : vector<8xf32>
    %12 = vector.multi_reduction <add>, %11, %cst_3 [1] : vector<8x32xf32> to vector<8xf32>
    %13 = vector.shape_cast %12 : vector<8xf32> to vector<8x1xf32>
    %14 = vector.broadcast %8 : vector<8x1xf32> to vector<8x32xf32>
    %15 = arith.subf %0, %14 : vector<8x32xf32>
    %16 = math.log %13 : vector<8x1xf32>
    %17 = vector.broadcast %16 : vector<8x1xf32> to vector<8x32xf32>
    %18 = arith.subf %15, %17 : vector<8x32xf32>
    %cst_4 = arith.constant -16.1180954 : f32
    %cst_5 = arith.constant -1.00000008E-7 : f32
    %19 = vector.broadcast %cst_4 : f32 to vector<8x32xf32>
    %20 = arith.maximumf %19, %18 : vector<8x32xf32>
    %21 = vector.broadcast %cst_5 : f32 to vector<8x32xf32>
    %22 = arith.minimumf %21, %20 : vector<8x32xf32>
    %cst_6 = arith.constant 0.000000e+00 : f32
    %23 = vector.broadcast %cst_6 : f32 to vector<8x32xf32>
    %24 = arith.subf %23, %6 : vector<8x32xf32>
    %25 = arith.mulf %24, %22 : vector<8x32xf32>
    %c0_i32 = arith.constant 0 : i32
    %26 = arith.cmpi eq, %arg1, %c0_i32 : i32
    %27 = arith.extui %26 : i1 to i32
    %c0_i32_7 = arith.constant 0 : i32
    %28 = arith.cmpi ne, %27, %c0_i32_7 : i32
    scf.if %28 {
      %cst_15 = arith.constant 0.000000e+00 : f32
      %37 = vector.broadcast %cst_15 : f32 to vector<1x32xf32>
      %c0_16 = arith.constant 0 : index
      %c0_17 = arith.constant 0 : index
      %38 = vector.load %arg5[%c0_16, %c0_17] : memref<1x32xf32, #tpu.memory_space<vmem>>, vector<1x32xf32>
      tpu.vector_store %arg5[%c0_16, %c0_17], %37 {strides = array<i32>} : memref<1x32xf32, #tpu.memory_space<vmem>>, vector<1x32xf32>,
    } else {
    }
    %c0_8 = arith.constant 0 : index
    %c0_9 = arith.constant 0 : index
    %29 = vector.load %arg5[%c0_8, %c0_9] : memref<1x32xf32, #tpu.memory_space<vmem>>, vector<1x32xf32>
    %cst_10 = arith.constant dense<0.000000e+00> : vector<32xf32>
    %30 = vector.multi_reduction <add>, %25, %cst_10 [0] : vector<8x32xf32> to vector<32xf32>
    %31 = vector.shape_cast %30 : vector<32xf32> to vector<1x32xf32>
    %32 = arith.addf %29, %31 : vector<1x32xf32>
    %c0_11 = arith.constant 0 : index
    %c0_12 = arith.constant 0 : index
    %33 = vector.load %arg5[%c0_11, %c0_12] : memref<1x32xf32, #tpu.memory_space<vmem>>, vector<1x32xf32>
    tpu.vector_store %arg5[%c0_11, %c0_12], %32 {strides = array<i32>} : memref<1x32xf32, #tpu.memory_space<vmem>>, vector<1x32xf32>,
    %c0_i32_13 = arith.constant 0 : i32
    %34 = arith.cmpi eq, %arg1, %c0_i32_13 : i32
    %35 = arith.extui %34 : i1 to i32
    %c0_i32_14 = arith.constant 0 : i32
    %36 = arith.cmpi ne, %35, %c0_i32_14 : i32
    scf.if %36 {
      %c0_15 = arith.constant 0 : index
      %c0_16 = arith.constant 0 : index
      %37 = vector.load %arg5[%c0_15, %c0_16] : memref<1x32xf32, #tpu.memory_space<vmem>>, vector<1x32xf32>
      %38 = vector.shape_cast %37 : vector<1x32xf32> to vector<1x1x32xf32>
      %cst_17 = arith.constant dense<0.000000e+00> : vector<1xf32>
      %39 = vector.multi_reduction <add>, %38, %cst_17 [1, 2] : vector<1x1x32xf32> to vector<1xf32>
      %40 = vector.shape_cast %39 : vector<1xf32> to vector<1x1x1xf32>
      %41 = vector.extract %40[0, 0, 0] : f32 from vector<1x1x1xf32>
      %42 = vector.broadcast %41 : f32 to vector<1x1x1xf32>
      %c0_18 = arith.constant 0 : index
      %c0_19 = arith.constant 0 : index
      %c0_20 = arith.constant 0 : index
      %43 = vector.load %arg4[%c0_18, %c0_19, %c0_20] : memref<1x1x1xf32, #tpu.memory_space<vmem>>, vector<1x1x1xf32>
      tpu.vector_store %arg4[%c0_18, %c0_19, %c0_20], %42 {strides = array<i32>} : memref<1x1x1xf32, #tpu.memory_space<vmem>>, vector<1x1x1xf32>,
    } else {
    }
    return
  }
  func.func @transform_0(%arg0: i32, %arg1: i32) -> (i32, i32) {
    %c1_i32 = arith.constant 1 : i32
    %0 = arith.muli %arg0, %c1_i32 : i32
    %1 = arith.addi %0, %arg1 : i32
    %c0_i32 = arith.constant 0 : i32
    %c0_i32_0 = arith.constant 0 : i32
    return %1, %c0_i32 : i32, i32
  }
  func.func @transform_1(%arg0: i32, %arg1: i32) -> (i32, i32) {
    %c1_i32 = arith.constant 1 : i32
    %0 = arith.muli %arg0, %c1_i32 : i32
    %1 = arith.addi %0, %arg1 : i32
    %c0_i32 = arith.constant 0 : i32
    %c0_i32_0 = arith.constant 0 : i32
    return %1, %c0_i32 : i32, i32
  }
  func.func @transform_2(%arg0: i32, %arg1: i32) -> (i32, i32, i32) {
    %c0_i32 = arith.constant 0 : i32
    %c0_i32_0 = arith.constant 0 : i32
    %c0_i32_1 = arith.constant 0 : i32
    return %arg0, %c0_i32, %c0_i32_0 : i32, i32, i32
  }
}

</mosaic_0001>

<llo_original>
// kernel: tpu_custom_call.1
$region0: #{tpu_custom_call.1}
  #allocation0 [shape = 'u32[]', space=smem, size = 0x4, offset = 0x4, fixed_abs, tag = 'smem constant byte address 0x4 - core index']
  #allocation1 [shape = 'u32[144,128]{1,0:T(1,128)}', space=vmem, size = 0x12000, scoped, tag = 'internal scratch']
  #allocation2 [shape = 'f32[1,32]{1,0:T(1,128)}', space=vmem, size = 0x200, scoped, tag = 'scratch operand']
  %s0 = inlined_call_operand.vmem [shape: f32[8,32], index: 0, kind: input, shape index: {}]
  %s1 = inlined_call_operand.vmem [shape: s32[8,1], index: 1, kind: input, shape index: {}]
  %s2 = inlined_call_operand.hbm [shape: f32[1,1,1], index: 2, kind: output, shape index: {}]
  %s3 = sld [smem:[#allocation0]]
  $region26: #{tpu_custom_call.1} parent=0
    _
  %s5 = ssub.s32 1, %s3
  %s6 = scalar_select 0, %s5, %s3
  $region1: #{tpu_custom_call.1} parent=0
    #allocation3 [shape = 'u8[512]{0}', space=vmem, size = 0x400, scoped, tag = 'output window, operand 0, single buffered']
    #allocation4 [shape = 's32[1]{0}', space=sflag, size = 0x4, scoped, tag = 'scoped memory for tpu_custom_call.1']
    %7 = vsyncpa [#allocation4], 0
    // Predicated region
    $region2: #{tpu_custom_call.1} parent=1 // pred_check
      _
    $region3: #{tpu_custom_call.1} parent=1 // pred_check_branch
      %9 = sbr.rel (0) target = $region5
    $region4: #{tpu_custom_call.1} parent=1 // pred_region
      %s10 = sadd.s32 0, 0
      %p11 = scmp.lt.s32.totalorder %s10, 0
      %s12 = scalar_select %p11, %s10, 0
      %s13 = smul.addr %s12, 8
      %s14 = scalar_lea.vmem %s0, %s13
      %s15 = sadd.s32 0, 0
    $region5: #{tpu_custom_call.1} parent=1 // pred_fallthru
      _
    // Predicated region
    $region6: #{tpu_custom_call.1} parent=1 // pred_check
      _
    $region7: #{tpu_custom_call.1} parent=1 // pred_check_branch
      %17 = sbr.rel (0) target = $region9
    $region8: #{tpu_custom_call.1} parent=1 // pred_region
      %s18 = sadd.s32 0, 0
      %p19 = scmp.lt.s32.totalorder %s18, 0
      %s20 = scalar_select %p19, %s18, 0
      %s21 = smul.addr %s20, 8
      %s22 = scalar_lea.vmem %s1, %s21
      %s23 = sadd.s32 0, 0
    $region9: #{tpu_custom_call.1} parent=1 // pred_fallthru
      _
    %s24 = sadd.s32 0, 0
    %p25 = scmp.lt.s32.totalorder %s24, 0
    %s26 = scalar_select %p25, %s24, 0
    %s27 = smul.addr %s26, 8
    %s28 = scalar_lea.vmem %s0, %s27
    %s29 = sadd.s32 0, 0
    %p30 = scmp.lt.s32.totalorder %s29, 0
    %s31 = scalar_select %p30, %s29, 0
    %s32 = smul.addr %s31, 8
    %s33 = scalar_lea.vmem %s1, %s32
    %s34 = sadd.s32 0, 0
    %p35 = scmp.lt.s32.totalorder %s34, 0
    %s36 = scalar_select %p35, %s34, 0
    %s37 = smul.addr %s36, 8
    %s38 = scalar_lea.vmem %s0, %s37
    %s39 = sadd.s32 0, 0
    %s40 = sadd.s32 0, 0
    %p41 = scmp.lt.s32.totalorder %s40, 0
    %s42 = scalar_select %p41, %s40, 0
    %s43 = smul.addr %s42, 8
    %s44 = scalar_lea.vmem %s1, %s43
    %s45 = sadd.s32 0, 0
    %v46 = vld [vmem:[%s38] sm:$0xff]
    %v47 = vlaneseq
    %v48 = vand.u32 %v47, 127
    %v49 = vld [vmem:[%s44] sm:$0xff]
    %50 = vset.pattern.permute.xlu0 0
    %51 = vperm.xlu0 %50, %v49
    %v52 = vpop.permute.xlu0 %51
    %vm53 = vcmp.eq.s32.totalorder %v48, %v52
    %v54 = vsel %vm53, 1, 0
    %v55 = vcvt.s32.f32 %v54
    %vm56 = vcmask 261120
    %v57 = vsel %vm56, %v46, -inf
    %58 = vmax.xlane.f32.xlu0 %v57
    %v59 = vpop.xlane.xlu0 %58
    %v60 = vsub.f32 %v46, %v59
    %v61 = vmul.f32 %v60, 1.442695
    %v62 = vpow.pop %v61
    %v63 = vsel %vm56, %v62, 0.0
    %64 = vadd.xlane.f32.xlu0 %v63
    %v65 = vpop.xlane.xlu0 %64
    %v66 = vlog2.pop %v65
    %v67 = vmul.f32 %v66, 0.6931472
    %v68 = vsub.f32 %v60, %v67
    %v69 = vmax.f32 %v68, -16.118095
    %v70 = vmin.f32 %v69, -1.0000001e-07
    %v71 = vsub.f32 0.0, %v55
    %v72 = vmul.f32 %v71, %v70
    %p73 = scmp.eq.s32.totalorder 0, 0
    // Predicated region
    $region10: #{tpu_custom_call.1} parent=1 // pred_check
      %p74 = pneg %p73
    $region11: #{tpu_custom_call.1} parent=1 // pred_check_branch
      %76 = sbr.rel (%p74) target = $region13
    $region12: #{tpu_custom_call.1} parent=1 // pred_region
      %vm77 = vcmask 253952
      %78 = vst.msk [vmem:[#allocation2] sm:$0x1] %vm77, 0.0
    $region13: #{tpu_custom_call.1} parent=1 // pred_fallthru
      _
    %v79 = vld [vmem:[#allocation2] sm:$0x1]
    %v80 = vsel %vm56, %v72, 0.0
    %v81 = vrot.slane %v80, 4
    %v82 = vadd.f32 %v80, %v81
    %v83 = vrot.slane %v82, 2
    %v84 = vadd.f32 %v82, %v83
    %v85 = vrot.slane %v84, 1
    %v86 = vadd.f32 %v84, %v85
    %v87 = vadd.f32 %v79, %v86
    %vm88 = vcmask 253952
    %89 = vst.msk [vmem:[#allocation2] sm:$0x1] %vm88, %v87
    // Predicated region
    $region14: #{tpu_custom_call.1} parent=1 // pred_check
      %p90 = pneg %p73
    $region15: #{tpu_custom_call.1} parent=1 // pred_check_branch
      %92 = sbr.rel (%p90) target = $region17
    $region16: #{tpu_custom_call.1} parent=1 // pred_region
      %v93 = vld [vmem:[#allocation2] sm:$0x1]
      %v94 = vsel %vm88, %v93, 0.0
      %95 = vadd.xlane.f32.xlu0 %v94
      %v96 = vpop.xlane.xlu0 %95
      %v97 = vrot.slane %v96, 4
      %v98 = vadd.f32 %v96, %v97
      %v99 = vrot.slane %v98, 2
      %v100 = vadd.f32 %v98, %v99
      %v101 = vrot.slane %v100, 1
      %v102 = vadd.f32 %v100, %v101
      %s103 = vtos %v102
      %v104 = vstv %s103
      %vm105 = vcmask 0
      %106 = vst.msk [vmem:[#allocation3] sm:$0x1] %vm105, %v104
    $region17: #{tpu_custom_call.1} parent=1 // pred_fallthru
      _
    // Predicated region
    $region18: #{tpu_custom_call.1} parent=1 // pred_check
      _
    $region19: #{tpu_custom_call.1} parent=1 // pred_check_branch
      %108 = sbr.rel (0) target = $region21
    $region20: #{tpu_custom_call.1} parent=1 // pred_region
      %s110 = ssub.s32 16, 16
      %111 = vsyncadd [#allocation4], %s110
      %s113 = sshll.u32 [#allocation3], 4
      %s114 = int_to_ptr.vmem [resolvable:$true] %s113
      %116 = dma.vmem_to_hbm [thread:$0]  %s114, 16, %s2, [#allocation4]
    $region21: #{tpu_custom_call.1} parent=1 // pred_fallthru
      _
    // Predicated region
    $region22: #{tpu_custom_call.1} parent=1 // pred_check
      _
    $region23: #{tpu_custom_call.1} parent=1 // pred_check_branch
      %118 = sbr.rel (0) target = $region25
    $region24: #{tpu_custom_call.1} parent=1 // pred_region
      %119 = dma.done [#allocation4], 16
    $region25: #{tpu_custom_call.1} parent=1 // pred_fallthru
      _
    %120 = vsyncpa [#allocation4], 1

</llo_original>
